<compile_context>
chip_gen: v7x
topology: tpu7x:2x2x1
jax: 0.10.0
libtpu: 0.0.40
codegen_flags: <defaults>
</compile_context>

<pallas_src>
import math

import jax
import jax.numpy as jnp
from jax.experimental import pallas as pl
from jax.experimental.pallas import tpu as pltpu


N_POLICY = 1968  # output features of PolicyHead.fc


def _round_up(x: int, m: int) -> int:
    return ((x + m - 1) // m) * m


def _policy_head_kernel(x_ref, w_ref, b_ref, o_ref):
    # x_ref: (bm, C)        rows of the flattened (B*T, C) input
    # w_ref: (C, N_pad)     fc.weight.T, zero-padded on the output dim to 128k
    # b_ref: (1, N_pad)     fc.bias, zero-padded to match
    # o_ref: (bm, N_pad)    lane-dense output slab
    out = jnp.dot(x_ref[...], w_ref[...], preferred_element_type=jnp.float32)
    out = out + b_ref[...]
    o_ref[...] = out.astype(o_ref.dtype)


def policy_head(x, w_fc, b_fc):
    """x: (B, T, C) f32; w_fc: (1968, C) (nn.Linear weight); b_fc: (1968,)."""
    B, T, C = x.shape
    N = w_fc.shape[0]
    assert w_fc.shape == (N, C) and b_fc.shape == (N,)

    # Flatten batch+seq into one row axis; single (or few) big grid steps.
    M = B * T
    x2 = x.reshape(M, C)

    # Row tiling: one block if small, else 256-row parallel blocks.
    if M <= 256:
        bm = _round_up(M, 8)
    else:
        bm = 256
    M_pad = _round_up(M, bm)
    if M_pad != M:
        x2 = jnp.pad(x2, ((0, M_pad - M), (0, 0)))

    # Lane-dense output: pad N up to a multiple of 128.
    N_pad = _round_up(N, 128)
    w_t = w_fc.T                                             # (C, N)
    if N_pad != N:
        w_t = jnp.pad(w_t, ((0, 0), (0, N_pad - N)))
        b_p = jnp.pad(b_fc, (0, N_pad - N)).reshape(1, N_pad)
    else:
        b_p = b_fc.reshape(1, N_pad)

    grid = (M_pad // bm,)

    out_pad = pl.pallas_call(
        _policy_head_kernel,
        out_shape=jax.ShapeDtypeStruct((M_pad, N_pad), x.dtype),
        grid_spec=pltpu.PrefetchScalarGridSpec(
            num_scalar_prefetch=0,
            grid=grid,
            in_specs=[
                pl.BlockSpec((bm, C), lambda i: (i, 0)),       # x rows
                pl.BlockSpec((C, N_pad), lambda i: (0, 0)),    # W^T (resident)
                pl.BlockSpec((1, N_pad), lambda i: (0, 0)),    # bias (resident)
            ],
            out_specs=pl.BlockSpec((bm, N_pad), lambda i: (i, 0)),
        ),
        compiler_params=pltpu.CompilerParams(
            dimension_semantics=("parallel",),
        ),
    )(x2, w_t, b_p)

    # Strip the padding and restore (B, T, N).
    return out_pad[:M, :N].reshape(B, T, N)


def _reference(x, w_fc, b_fc):
    """Pure-JAX reference mirroring the PyTorch forward: x @ W.T + b."""
    return jnp.einsum("btc,nc->btn", x, w_fc) + b_fc


if __name__ == "__main__":
    # Small config consistent with the module: n_embd=32, B=2, T=8.
    B, T, C = 2, 8, 32

    key = jax.random.PRNGKey(0)
    kx, kw, kb = jax.random.split(key, 3)

    x = jax.random.normal(kx, (B, T, C), dtype=jnp.float32)

    # nn.Linear-style init: weight (out, in), bias (out,), uniform(+-1/sqrt(in)).
    bound = 1.0 / math.sqrt(C)
    w_fc = jax.random.uniform(kw, (N_POLICY, C), jnp.float32, -bound, bound)
    b_fc = jax.random.uniform(kb, (N_POLICY,), jnp.float32, -bound, bound)

    out = jax.jit(policy_head)(x, w_fc, b_fc)
    out = jax.block_until_ready(out)

    ref = _reference(x, w_fc, b_fc)
    assert out.shape == (B, T, N_POLICY)
    assert jnp.allclose(out, ref, atol=1e-4, rtol=1e-4), "mismatch vs JAX reference"

    print("KERNEL_OK")
</pallas_src>

<mosaic_0001>
module attributes {stable_mosaic.version = 11 : i64} {
  func.func @_policy_head_kernel(%arg0: i32, %arg1: memref<16x32xf32, #tpu.memory_space<vmem>>, %arg2: memref<32x2048xf32, #tpu.memory_space<vmem>>, %arg3: memref<1x2048xf32, #tpu.memory_space<vmem>>, %arg4: memref<16x2048xf32, #tpu.memory_space<vmem>>) attributes {dimension_semantics = [#tpu.dimension_semantics<parallel>], iteration_bounds = array<i64: 1>, scalar_prefetch = 0 : i64, scratch_operands = 0 : i64, tpu.core_type = #tpu.core_type<tc>, window_params = [{transform_indices = @transform_0, window_bounds = array<i64: 16, 32>}, {pipeline_mode = #tpu.pipeline_mode<synchronous>, transform_indices = @transform_1, window_bounds = array<i64: 32, 2048>}, {pipeline_mode = #tpu.pipeline_mode<synchronous>, transform_indices = @transform_2, window_bounds = array<i64: 1, 2048>}, {transform_indices = @transform_3, window_bounds = array<i64: 16, 2048>}]} {
    %c0 = arith.constant 0 : index
    %c0_0 = arith.constant 0 : index
    %0 = vector.load %arg1[%c0, %c0_0] : memref<16x32xf32, #tpu.memory_space<vmem>>, vector<16x32xf32>
    %c0_1 = arith.constant 0 : index
    %c0_2 = arith.constant 0 : index
    %1 = vector.load %arg2[%c0_1, %c0_2] : memref<32x2048xf32, #tpu.memory_space<vmem>>, vector<32x2048xf32>
    %cst = arith.constant dense<0.000000e+00> : vector<16x2048xf32>
    %2 = tpu.matmul %0, %1, %cst {dimension_numbers = #tpu.dot_dimension_numbers<[1], [0], [0], [1], [0, 0, 1, 1], [], []>} : vector<16x32xf32>, vector<32x2048xf32>, vector<16x2048xf32> -> vector<16x2048xf32>
    %c0_3 = arith.constant 0 : index
    %c0_4 = arith.constant 0 : index
    %3 = vector.load %arg3[%c0_3, %c0_4] : memref<1x2048xf32, #tpu.memory_space<vmem>>, vector<1x2048xf32>
    %4 = vector.broadcast %3 : vector<1x2048xf32> to vector<16x2048xf32>
    %5 = arith.addf %2, %4 : vector<16x2048xf32>
    %c0_5 = arith.constant 0 : index
    %c0_6 = arith.constant 0 : index
    %6 = vector.load %arg4[%c0_5, %c0_6] : memref<16x2048xf32, #tpu.memory_space<vmem>>, vector<16x2048xf32>
    tpu.vector_store %arg4[%c0_5, %c0_6], %5 {strides = array<i32>} : memref<16x2048xf32, #tpu.memory_space<vmem>>, vector<16x2048xf32>,
    return
  }
  func.func @transform_0(%arg0: i32) -> (i32, i32) {
    %c0_i32 = arith.constant 0 : i32
    %c0_i32_0 = arith.constant 0 : i32
    return %arg0, %c0_i32 : i32, i32
  }
  func.func @transform_1(%arg0: i32) -> (i32, i32) {
    %c0_i32 = arith.constant 0 : i32
    %c0_i32_0 = arith.constant 0 : i32
    %c0_i32_1 = arith.constant 0 : i32
    return %c0_i32, %c0_i32_0 : i32, i32
  }
  func.func @transform_2(%arg0: i32) -> (i32, i32) {
    %c0_i32 = arith.constant 0 : i32
    %c0_i32_0 = arith.constant 0 : i32
    %c0_i32_1 = arith.constant 0 : i32
    return %c0_i32, %c0_i32_0 : i32, i32
  }
  func.func @transform_3(%arg0: i32) -> (i32, i32) {
    %c0_i32 = arith.constant 0 : i32
    %c0_i32_0 = arith.constant 0 : i32
    return %arg0, %c0_i32 : i32, i32
  }
}

</mosaic_0001>

<llo_original>
// kernel: policy_head.1
$region0: #{policy_head.1}
  #allocation0 [shape = 'u32[]', space=smem, size = 0x4, offset = 0x4, fixed_abs, tag = 'smem constant byte address 0x4 - core index']
  #allocation1 [shape = 'u32[144,128]{1,0:T(1,128)}', space=vmem, size = 0x12000, scoped, tag = 'internal scratch']
  %s0 = inlined_call_operand.vmem [shape: f32[16,32], index: 0, kind: input, shape index: {}]
  %s1 = inlined_call_operand.vmem [shape: f32[32,2048], index: 1, kind: input, shape index: {}]
  %s2 = inlined_call_operand.vmem [shape: f32[1,2048], index: 2, kind: input, shape index: {}]
  %s3 = inlined_call_operand.vmem [shape: f32[16,2048], index: 3, kind: output, shape index: {}]
  %s4 = sld [smem:[#allocation0]]
  $region22: #{policy_head.1} parent=0
    _
  %s6 = ssub.s32 1, %s4
  %s7 = scalar_select 0, %s6, %s4
  // Predicated region
  $region2: #{policy_head.1} parent=0 // pred_check
    _
  $region3: #{policy_head.1} parent=0 // pred_check_branch
    %9 = sbr.rel (0) target = $region5
  $region4: #{policy_head.1} parent=0 // pred_region
    _
  $region5: #{policy_head.1} parent=0 // pred_fallthru
    _
  // Predicated region
  $region6: #{policy_head.1} parent=0 // pred_check
    _
  $region7: #{policy_head.1} parent=0 // pred_check_branch
    %11 = sbr.rel (0) target = $region9
  $region8: #{policy_head.1} parent=0 // pred_region
    _
  $region9: #{policy_head.1} parent=0 // pred_fallthru
    _
  // Predicated region
  $region10: #{policy_head.1} parent=0 // pred_check
    _
  $region11: #{policy_head.1} parent=0 // pred_check_branch
    %13 = sbr.rel (0) target = $region13
  $region12: #{policy_head.1} parent=0 // pred_region
    _
  $region13: #{policy_head.1} parent=0 // pred_fallthru
    _
  %v14 = vld [vmem:[%s0] sm:$0xff]
  %v15 = vld [vmem:[%s0 + $0x8] sm:$0xff]
  %v16 = vld [vmem:[%s1] sm:$0xff]
  %v17 = vld [vmem:[%s1 + $0x8] sm:$0xff]
  %v18 = vld [vmem:[%s1 + $0x10] sm:$0xff]
  %v19 = vld [vmem:[%s1 + $0x18] sm:$0xff]
  %v20 = vld [vmem:[%s1 + $0x20] sm:$0xff]
  %v21 = vld [vmem:[%s1 + $0x28] sm:$0xff]
  %v22 = vld [vmem:[%s1 + $0x30] sm:$0xff]
  %v23 = vld [vmem:[%s1 + $0x38] sm:$0xff]
  %v24 = vld [vmem:[%s1 + $0x40] sm:$0xff]
  %v25 = vld [vmem:[%s1 + $0x48] sm:$0xff]
  %v26 = vld [vmem:[%s1 + $0x50] sm:$0xff]
  %v27 = vld [vmem:[%s1 + $0x58] sm:$0xff]
  %v28 = vld [vmem:[%s1 + $0x60] sm:$0xff]
  %v29 = vld [vmem:[%s1 + $0x68] sm:$0xff]
  %v30 = vld [vmem:[%s1 + $0x70] sm:$0xff]
  %v31 = vld [vmem:[%s1 + $0x78] sm:$0xff]
  %v32 = vld [vmem:[%s1 + $0x80] sm:$0xff]
  %v33 = vld [vmem:[%s1 + $0x88] sm:$0xff]
  %v34 = vld [vmem:[%s1 + $0x90] sm:$0xff]
  %v35 = vld [vmem:[%s1 + $0x98] sm:$0xff]
  %v36 = vld [vmem:[%s1 + $0xa0] sm:$0xff]
  %v37 = vld [vmem:[%s1 + $0xa8] sm:$0xff]
  %v38 = vld [vmem:[%s1 + $0xb0] sm:$0xff]
  %v39 = vld [vmem:[%s1 + $0xb8] sm:$0xff]
  %v40 = vld [vmem:[%s1 + $0xc0] sm:$0xff]
  %v41 = vld [vmem:[%s1 + $0xc8] sm:$0xff]
  %v42 = vld [vmem:[%s1 + $0xd0] sm:$0xff]
  %v43 = vld [vmem:[%s1 + $0xd8] sm:$0xff]
  %v44 = vld [vmem:[%s1 + $0xe0] sm:$0xff]
  %v45 = vld [vmem:[%s1 + $0xe8] sm:$0xff]
  %v46 = vld [vmem:[%s1 + $0xf0] sm:$0xff]
  %v47 = vld [vmem:[%s1 + $0xf8] sm:$0xff]
  %v48 = vld [vmem:[%s1 + $0x100] sm:$0xff]
  %v49 = vld [vmem:[%s1 + $0x108] sm:$0xff]
  %v50 = vld [vmem:[%s1 + $0x110] sm:$0xff]
  %v51 = vld [vmem:[%s1 + $0x118] sm:$0xff]
  %v52 = vld [vmem:[%s1 + $0x120] sm:$0xff]
  %v53 = vld [vmem:[%s1 + $0x128] sm:$0xff]
  %v54 = vld [vmem:[%s1 + $0x130] sm:$0xff]
  %v55 = vld [vmem:[%s1 + $0x138] sm:$0xff]
  %v56 = vld [vmem:[%s1 + $0x140] sm:$0xff]
  %v57 = vld [vmem:[%s1 + $0x148] sm:$0xff]
  %v58 = vld [vmem:[%s1 + $0x150] sm:$0xff]
  %v59 = vld [vmem:[%s1 + $0x158] sm:$0xff]
  %v60 = vld [vmem:[%s1 + $0x160] sm:$0xff]
  %v61 = vld [vmem:[%s1 + $0x168] sm:$0xff]
  %v62 = vld [vmem:[%s1 + $0x170] sm:$0xff]
  %v63 = vld [vmem:[%s1 + $0x178] sm:$0xff]
  %v64 = vld [vmem:[%s1 + $0x180] sm:$0xff]
  %v65 = vld [vmem:[%s1 + $0x188] sm:$0xff]
  %v66 = vld [vmem:[%s1 + $0x190] sm:$0xff]
  %v67 = vld [vmem:[%s1 + $0x198] sm:$0xff]
  %v68 = vld [vmem:[%s1 + $0x1a0] sm:$0xff]
  %v69 = vld [vmem:[%s1 + $0x1a8] sm:$0xff]
  %v70 = vld [vmem:[%s1 + $0x1b0] sm:$0xff]
  %v71 = vld [vmem:[%s1 + $0x1b8] sm:$0xff]
  %v72 = vld [vmem:[%s1 + $0x1c0] sm:$0xff]
  %v73 = vld [vmem:[%s1 + $0x1c8] sm:$0xff]
  %v74 = vld [vmem:[%s1 + $0x1d0] sm:$0xff]
  %v75 = vld [vmem:[%s1 + $0x1d8] sm:$0xff]
  %v76 = vld [vmem:[%s1 + $0x1e0] sm:$0xff]
  %v77 = vld [vmem:[%s1 + $0x1e8] sm:$0xff]
  %v78 = vld [vmem:[%s1 + $0x1f0] sm:$0xff]
  %v79 = vld [vmem:[%s1 + $0x1f8] sm:$0xff]
  %v80 = vld [vmem:[%s2] sm:$0xff]
  %v81 = vld [vmem:[%s2 + $0x8] sm:$0xff]
  %v84 = vlaneseq
  %v85 = vshrl.u32 %v84, 7
  %v86 = vsub.s32 0, %v85
  %v87 = vrot.slane %v80, %v86
  %v88 = vlaneseq
  %v89 = vshrl.u32 %v88, 7
  %v90 = vsub.s32 1, %v89
  %v91 = vrot.slane %v80, %v90
  %v92 = vlaneseq
  %v93 = vshrl.u32 %v92, 7
  %v94 = vsub.s32 2, %v93
  %v95 = vrot.slane %v80, %v94
  %v96 = vlaneseq
  %v97 = vshrl.u32 %v96, 7
  %v98 = vsub.s32 3, %v97
  %v99 = vrot.slane %v80, %v98
  %v100 = vlaneseq
  %v101 = vshrl.u32 %v100, 7
  %v102 = vsub.s32 4, %v101
  %v103 = vrot.slane %v80, %v102
  %v104 = vlaneseq
  %v105 = vshrl.u32 %v104, 7
  %v106 = vsub.s32 5, %v105
  %v107 = vrot.slane %v80, %v106
  %v108 = vlaneseq
  %v109 = vshrl.u32 %v108, 7
  %v110 = vsub.s32 6, %v109
  %v111 = vrot.slane %v80, %v110
  %v112 = vlaneseq
  %v113 = vshrl.u32 %v112, 7
  %v114 = vsub.s32 7, %v113
  %v115 = vrot.slane %v80, %v114
  %v116 = vlaneseq
  %v117 = vshrl.u32 %v116, 7
  %v118 = vsub.s32 0, %v117
  %v119 = vrot.slane %v81, %v118
  %v120 = vlaneseq
  %v121 = vshrl.u32 %v120, 7
  %v122 = vsub.s32 1, %v121
  %v123 = vrot.slane %v81, %v122
  %v124 = vlaneseq
  %v125 = vshrl.u32 %v124, 7
  %v126 = vsub.s32 2, %v125
  %v127 = vrot.slane %v81, %v126
  %v128 = vlaneseq
  %v129 = vshrl.u32 %v128, 7
  %v130 = vsub.s32 3, %v129
  %v131 = vrot.slane %v81, %v130
  %v132 = vlaneseq
  %v133 = vshrl.u32 %v132, 7
  %v134 = vsub.s32 4, %v133
  %v135 = vrot.slane %v81, %v134
  %v136 = vlaneseq
  %v137 = vshrl.u32 %v136, 7
  %v138 = vsub.s32 5, %v137
  %v139 = vrot.slane %v81, %v138
  %v140 = vlaneseq
  %v141 = vshrl.u32 %v140, 7
  %v142 = vsub.s32 6, %v141
  %v143 = vrot.slane %v81, %v142
  %v144 = vlaneseq
  %v145 = vshrl.u32 %v144, 7
  %v146 = vsub.s32 7, %v145
  %v147 = vrot.slane %v81, %v146
  %vm164 = vcmask 261120
  %v166 = vsel %vm164, %v14, 0
  %v169 = vsel %vm164, %v15, 0
  %171 = vmatprep.subr.mxu0 %v17
  %172 = vmatpush1.msra.mxu0 %v16
  %173 = vmatprep.subr.mxu0 %v33
  %174 = vmatpush1.msra.mxu0 %v32
  %175 = vmatprep.subr.mxu0 %v49
  %176 = vmatpush1.msra.mxu0 %v48
  %177 = vmatprep.subr.mxu0 %v65
  %178 = vmatpush1.msra.mxu0 %v64
  %179 = vmatprep.subr.mxu0 0.0
  %180 = vmatpush1.msra.mxu0 0.0
  %181 = vmatprep.subr.mxu0 0.0
  %182 = vmatpush1.msra.mxu0 0.0
  %183 = vmatprep.subr.mxu0 0.0
  %184 = vmatpush1.msra.mxu0 0.0
  %185 = vmatprep.subr.mxu0 0.0
  %186 = vmatpush1.msra.mxu0 0.0
  %187 = vmatprep.subr.mxu0 0.0
  %188 = vmatpush1.msra.mxu0 0.0
  %189 = vmatprep.subr.mxu0 0.0
  %190 = vmatpush1.msra.mxu0 0.0
  %191 = vmatprep.subr.mxu0 0.0
  %192 = vmatpush1.msra.mxu0 0.0
  %193 = vmatprep.subr.mxu0 0.0
  %194 = vmatpush1.msra.mxu0 0.0
  %195 = vmatprep.subr.mxu0 0.0
  %196 = vmatpush1.msra.mxu0 0.0
  %197 = vmatprep.subr.mxu0 0.0
  %198 = vmatpush1.msra.mxu0 0.0
  %199 = vmatprep.subr.mxu0 0.0
  %200 = vmatpush1.msra.mxu0 0.0
  %201 = vmatprep.subr.mxu0 0.0
  %202 = vmatpush1.msra.mxu0 0.0
  %203 = vmatprep.subr.mxu0 0.0
  %204 = vmatpush1.msra.mxu0 0.0
  %205 = vmatprep.subr.mxu0 0.0
  %206 = vmatpush1.msra.mxu0 0.0
  %207 = vmatprep.subr.mxu0 0.0
  %208 = vmatpush1.msra.mxu0 0.0
  %209 = vmatprep.subr.mxu0 0.0
  %210 = vmatpush1.msra.mxu0 0.0
  %211 = vmatprep.subr.mxu0 0.0
  %212 = vmatpush1.msra.mxu0 0.0
  %213 = vmatprep.subr.mxu0 0.0
  %214 = vmatpush1.msra.mxu0 0.0
  %215 = vmatprep.subr.mxu0 0.0
  %216 = vmatpush1.msra.mxu0 0.0
  %217 = vmatprep.subr.mxu0 0.0
  %218 = vmatpush1.msra.mxu0 0.0
  %219 = vmatprep.subr.mxu0 0.0
  %220 = vmatpush1.msra.mxu0 0.0
  %221 = vmatprep.subr.mxu0 0.0
  %222 = vmatpush1.msra.mxu0 0.0
  %223 = vmatprep.subr.mxu0 0.0
  %224 = vmatpush1.msra.mxu0 0.0
  %225 = vmatprep.subr.mxu0 0.0
  %226 = vmatpush1.msra.mxu0 0.0
  %227 = vmatprep.subr.mxu0 0.0
  %228 = vmatpush1.msra.mxu0 0.0
  %229 = vmatprep.subr.mxu0 0.0
  %230 = vmatpush1.msra.mxu0 0.0
  %231 = vmatprep.subr.mxu0 0.0
  %232 = vmatpush1.msra.mxu0 0.0
  %233 = vmatprep.subr.mxu0 0.0
  %234 = vmatpush1.msra.mxu0 0.0
  %235 = vmatprep.mubr.f32.mxu0 0.0
  %236 = vmatmul.mubr.f32.gmra.mrb[0].mxu0 %v166
  %v237 = vpop.f32.mrb[0].mxu0
  %v238 = vadd.f32 %v87, %v237
  %v239 = vpop.f32.mrb[0].mxu0
  %v240 = vadd.f32 %v91, %v239
  %241 = vmatprep.mubr.f32.mxu0 0.0
  %242 = vmatmul.mubr.f32.gmra.mrb[0].mxu0 %v169
  %v243 = vpop.f32.mrb[0].mxu0
  %v244 = vadd.f32 %v87, %v243
  %v245 = vpop.f32.mrb[0].mxu0
  %v246 = vadd.f32 %v91, %v245
  %247 = vdwg.mxu0
  %248 = vmatprep.subr.mxu0 %v19
  %249 = vmatpush1.msra.mxu0 %v18
  %250 = vmatprep.subr.mxu0 %v35
  %251 = vmatpush1.msra.mxu0 %v34
  %252 = vmatprep.subr.mxu0 %v51
  %253 = vmatpush1.msra.mxu0 %v50
  %254 = vmatprep.subr.mxu0 %v67
  %255 = vmatpush1.msra.mxu0 %v66
  %256 = vmatprep.subr.mxu0 0.0
  %257 = vmatpush1.msra.mxu0 0.0
  %258 = vmatprep.subr.mxu0 0.0
  %259 = vmatpush1.msra.mxu0 0.0
  %260 = vmatprep.subr.mxu0 0.0
  %261 = vmatpush1.msra.mxu0 0.0
  %262 = vmatprep.subr.mxu0 0.0
  %263 = vmatpush1.msra.mxu0 0.0
  %264 = vmatprep.subr.mxu0 0.0
  %265 = vmatpush1.msra.mxu0 0.0
  %266 = vmatprep.subr.mxu0 0.0
  %267 = vmatpush1.msra.mxu0 0.0
  %268 = vmatprep.subr.mxu0 0.0
  %269 = vmatpush1.msra.mxu0 0.0
  %270 = vmatprep.subr.mxu0 0.0
  %271 = vmatpush1.msra.mxu0 0.0
  %272 = vmatprep.subr.mxu0 0.0
  %273 = vmatpush1.msra.mxu0 0.0
  %274 = vmatprep.subr.mxu0 0.0
  %275 = vmatpush1.msra.mxu0 0.0
  %276 = vmatprep.subr.mxu0 0.0
  %277 = vmatpush1.msra.mxu0 0.0
  %278 = vmatprep.subr.mxu0 0.0
  %279 = vmatpush1.msra.mxu0 0.0
  %280 = vmatprep.subr.mxu0 0.0
  %281 = vmatpush1.msra.mxu0 0.0
  %282 = vmatprep.subr.mxu0 0.0
  %283 = vmatpush1.msra.mxu0 0.0
  %284 = vmatprep.subr.mxu0 0.0
  %285 = vmatpush1.msra.mxu0 0.0
  %286 = vmatprep.subr.mxu0 0.0
  %287 = vmatpush1.msra.mxu0 0.0
  %288 = vmatprep.subr.mxu0 0.0
  %289 = vmatpush1.msra.mxu0 0.0
  %290 = vmatprep.subr.mxu0 0.0
  %291 = vmatpush1.msra.mxu0 0.0
  %292 = vmatprep.subr.mxu0 0.0
  %293 = vmatpush1.msra.mxu0 0.0
  %294 = vmatprep.subr.mxu0 0.0
  %295 = vmatpush1.msra.mxu0 0.0
  %296 = vmatprep.subr.mxu0 0.0
  %297 = vmatpush1.msra.mxu0 0.0
  %298 = vmatprep.subr.mxu0 0.0
  %299 = vmatpush1.msra.mxu0 0.0
  %300 = vmatprep.subr.mxu0 0.0
  %301 = vmatpush1.msra.mxu0 0.0
  %302 = vmatprep.subr.mxu0 0.0
  %303 = vmatpush1.msra.mxu0 0.0
  %304 = vmatprep.subr.mxu0 0.0
  %305 = vmatpush1.msra.mxu0 0.0
  %306 = vmatprep.subr.mxu0 0.0
  %307 = vmatpush1.msra.mxu0 0.0
  %308 = vmatprep.subr.mxu0 0.0
  %309 = vmatpush1.msra.mxu0 0.0
  %310 = vmatprep.subr.mxu0 0.0
  %311 = vmatpush1.msra.mxu0 0.0
  %312 = vmatprep.mubr.f32.mxu0 0.0
  %313 = vmatmul.mubr.f32.gmra.mrb[0].mxu0 %v166
  %v314 = vpop.f32.mrb[0].mxu0
  %v315 = vadd.f32 %v95, %v314
  %v316 = vpop.f32.mrb[0].mxu0
  %v317 = vadd.f32 %v99, %v316
  %318 = vmatprep.mubr.f32.mxu0 0.0
  %319 = vmatmul.mubr.f32.gmra.mrb[0].mxu0 %v169
  %v320 = vpop.f32.mrb[0].mxu0
  %v321 = vadd.f32 %v95, %v320
  %v322 = vpop.f32.mrb[0].mxu0
  %v323 = vadd.f32 %v99, %v322
  %324 = vdwg.mxu0
  %325 = vmatprep.subr.mxu0 %v21
  %326 = vmatpush1.msra.mxu0 %v20
  %327 = vmatprep.subr.mxu0 %v37
  %328 = vmatpush1.msra.mxu0 %v36
  %329 = vmatprep.subr.mxu0 %v53
  %330 = vmatpush1.msra.mxu0 %v52
  %331 = vmatprep.subr.mxu0 %v69
  %332 = vmatpush1.msra.mxu0 %v68
  %333 = vmatprep.subr.mxu0 0.0
  %334 = vmatpush1.msra.mxu0 0.0
  %335 = vmatprep.subr.mxu0 0.0
  %336 = vmatpush1.msra.mxu0 0.0
  %337 = vmatprep.subr.mxu0 0.0
  %338 = vmatpush1.msra.mxu0 0.0
  %339 = vmatprep.subr.mxu0 0.0
  %340 = vmatpush1.msra.mxu0 0.0
  %341 = vmatprep.subr.mxu0 0.0
  %342 = vmatpush1.msra.mxu0 0.0
  %343 = vmatprep.subr.mxu0 0.0
  %344 = vmatpush1.msra.mxu0 0.0
  %345 = vmatprep.subr.mxu0 0.0
  %346 = vmatpush1.msra.mxu0 0.0
  %347 = vmatprep.subr.mxu0 0.0
  %348 = vmatpush1.msra.mxu0 0.0
  %349 = vmatprep.subr.mxu0 0.0
  %350 = vmatpush1.msra.mxu0 0.0
  %351 = vmatprep.subr.mxu0 0.0
  %352 = vmatpush1.msra.mxu0 0.0
  %353 = vmatprep.subr.mxu0 0.0
  %354 = vmatpush1.msra.mxu0 0.0
  %355 = vmatprep.subr.mxu0 0.0
  %356 = vmatpush1.msra.mxu0 0.0
  %357 = vmatprep.subr.mxu0 0.0
  %358 = vmatpush1.msra.mxu0 0.0
  %359 = vmatprep.subr.mxu0 0.0
  %360 = vmatpush1.msra.mxu0 0.0
  %361 = vmatprep.subr.mxu0 0.0
  %362 = vmatpush1.msra.mxu0 0.0
  %363 = vmatprep.subr.mxu0 0.0
  %364 = vmatpush1.msra.mxu0 0.0
  %365 = vmatprep.subr.mxu0 0.0
  %366 = vmatpush1.msra.mxu0 0.0
  %367 = vmatprep.subr.mxu0 0.0
  %368 = vmatpush1.msra.mxu0 0.0
  %369 = vmatprep.subr.mxu0 0.0
  %370 = vmatpush1.msra.mxu0 0.0
  %371 = vmatprep.subr.mxu0 0.0
  %372 = vmatpush1.msra.mxu0 0.0
  %373 = vmatprep.subr.mxu0 0.0
  %374 = vmatpush1.msra.mxu0 0.0
  %375 = vmatprep.subr.mxu0 0.0
  %376 = vmatpush1.msra.mxu0 0.0
  %377 = vmatprep.subr.mxu0 0.0
  %378 = vmatpush1.msra.mxu0 0.0
  %379 = vmatprep.subr.mxu0 0.0
  %380 = vmatpush1.msra.mxu0 0.0
  %381 = vmatprep.subr.mxu0 0.0
  %382 = vmatpush1.msra.mxu0 0.0
  %383 = vmatprep.subr.mxu0 0.0
  %384 = vmatpush1.msra.mxu0 0.0
  %385 = vmatprep.subr.mxu0 0.0
  %386 = vmatpush1.msra.mxu0 0.0
  %387 = vmatprep.subr.mxu0 0.0
  %388 = vmatpush1.msra.mxu0 0.0
  %389 = vmatprep.mubr.f32.mxu0 0.0
  %390 = vmatmul.mubr.f32.gmra.mrb[0].mxu0 %v166
  %v391 = vpop.f32.mrb[0].mxu0
  %v392 = vadd.f32 %v103, %v391
  %v393 = vpop.f32.mrb[0].mxu0
  %v394 = vadd.f32 %v107, %v393
  %395 = vmatprep.mubr.f32.mxu0 0.0
  %396 = vmatmul.mubr.f32.gmra.mrb[0].mxu0 %v169
  %v397 = vpop.f32.mrb[0].mxu0
  %v398 = vadd.f32 %v103, %v397
  %v399 = vpop.f32.mrb[0].mxu0
  %v400 = vadd.f32 %v107, %v399
  %401 = vdwg.mxu0
  %402 = vmatprep.subr.mxu0 %v23
  %403 = vmatpush1.msra.mxu0 %v22
  %404 = vmatprep.subr.mxu0 %v39
  %405 = vmatpush1.msra.mxu0 %v38
  %406 = vmatprep.subr.mxu0 %v55
  %407 = vmatpush1.msra.mxu0 %v54
  %408 = vmatprep.subr.mxu0 %v71
  %409 = vmatpush1.msra.mxu0 %v70
  %410 = vmatprep.subr.mxu0 0.0
  %411 = vmatpush1.msra.mxu0 0.0
  %412 = vmatprep.subr.mxu0 0.0
  %413 = vmatpush1.msra.mxu0 0.0
  %414 = vmatprep.subr.mxu0 0.0
  %415 = vmatpush1.msra.mxu0 0.0
  %416 = vmatprep.subr.mxu0 0.0
  %417 = vmatpush1.msra.mxu0 0.0
  %418 = vmatprep.subr.mxu0 0.0
  %419 = vmatpush1.msra.mxu0 0.0
  %420 = vmatprep.subr.mxu0 0.0
  %421 = vmatpush1.msra.mxu0 0.0
  %422 = vmatprep.subr.mxu0 0.0
  %423 = vmatpush1.msra.mxu0 0.0
  %424 = vmatprep.subr.mxu0 0.0
  %425 = vmatpush1.msra.mxu0 0.0
  %426 = vmatprep.subr.mxu0 0.0
  %427 = vmatpush1.msra.mxu0 0.0
  %428 = vmatprep.subr.mxu0 0.0
  %429 = vmatpush1.msra.mxu0 0.0
  %430 = vmatprep.subr.mxu0 0.0
  %431 = vmatpush1.msra.mxu0 0.0
  %432 = vmatprep.subr.mxu0 0.0
  %433 = vmatpush1.msra.mxu0 0.0
  %434 = vmatprep.subr.mxu0 0.0
  %435 = vmatpush1.msra.mxu0 0.0
  %436 = vmatprep.subr.mxu0 0.0
  %437 = vmatpush1.msra.mxu0 0.0
  %438 = vmatprep.subr.mxu0 0.0
  %439 = vmatpush1.msra.mxu0 0.0
  %440 = vmatprep.subr.mxu0 0.0
  %441 = vmatpush1.msra.mxu0 0.0
  %442 = vmatprep.subr.mxu0 0.0
  %443 = vmatpush1.msra.mxu0 0.0
  %444 = vmatprep.subr.mxu0 0.0
  %445 = vmatpush1.msra.mxu0 0.0
  %446 = vmatprep.subr.mxu0 0.0
  %447 = vmatpush1.msra.mxu0 0.0
  %448 = vmatprep.subr.mxu0 0.0
  %449 = vmatpush1.msra.mxu0 0.0
  %450 = vmatprep.subr.mxu0 0.0
  %451 = vmatpush1.msra.mxu0 0.0
  %452 = vmatprep.subr.mxu0 0.0
  %453 = vmatpush1.msra.mxu0 0.0
  %454 = vmatprep.subr.mxu0 0.0
  %455 = vmatpush1.msra.mxu0 0.0
  %456 = vmatprep.subr.mxu0 0.0
  %457 = vmatpush1.msra.mxu0 0.0
  %458 = vmatprep.subr.mxu0 0.0
  %459 = vmatpush1.msra.mxu0 0.0
  %460 = vmatprep.subr.mxu0 0.0
  %461 = vmatpush1.msra.mxu0 0.0
  %462 = vmatprep.subr.mxu0 0.0
  %463 = vmatpush1.msra.mxu0 0.0
  %464 = vmatprep.subr.mxu0 0.0
  %465 = vmatpush1.msra.mxu0 0.0
  %466 = vmatprep.mubr.f32.mxu0 0.0
  %467 = vmatmul.mubr.f32.gmra.mrb[0].mxu0 %v166
  %v468 = vpop.f32.mrb[0].mxu0
  %v469 = vadd.f32 %v111, %v468
  %v470 = vpop.f32.mrb[0].mxu0
  %v471 = vadd.f32 %v115, %v470
  %472 = vmatprep.mubr.f32.mxu0 0.0
  %473 = vmatmul.mubr.f32.gmra.mrb[0].mxu0 %v169
  %v474 = vpop.f32.mrb[0].mxu0
  %v475 = vadd.f32 %v111, %v474
  %v476 = vpop.f32.mrb[0].mxu0
  %v477 = vadd.f32 %v115, %v476
  %478 = vdwg.mxu0
  %479 = vmatprep.subr.mxu0 %v25
  %480 = vmatpush1.msra.mxu0 %v24
  %481 = vmatprep.subr.mxu0 %v41
  %482 = vmatpush1.msra.mxu0 %v40
  %483 = vmatprep.subr.mxu0 %v57
  %484 = vmatpush1.msra.mxu0 %v56
  %485 = vmatprep.subr.mxu0 %v73
  %486 = vmatpush1.msra.mxu0 %v72
  %487 = vmatprep.subr.mxu0 0.0
  %488 = vmatpush1.msra.mxu0 0.0
  %489 = vmatprep.subr.mxu0 0.0
  %490 = vmatpush1.msra.mxu0 0.0
  %491 = vmatprep.subr.mxu0 0.0
  %492 = vmatpush1.msra.mxu0 0.0
  %493 = vmatprep.subr.mxu0 0.0
  %494 = vmatpush1.msra.mxu0 0.0
  %495 = vmatprep.subr.mxu0 0.0
  %496 = vmatpush1.msra.mxu0 0.0
  %497 = vmatprep.subr.mxu0 0.0
  %498 = vmatpush1.msra.mxu0 0.0
  %499 = vmatprep.subr.mxu0 0.0
  %500 = vmatpush1.msra.mxu0 0.0
  %501 = vmatprep.subr.mxu0 0.0
  %502 = vmatpush1.msra.mxu0 0.0
  %503 = vmatprep.subr.mxu0 0.0
  %504 = vmatpush1.msra.mxu0 0.0
  %505 = vmatprep.subr.mxu0 0.0
  %506 = vmatpush1.msra.mxu0 0.0
  %507 = vmatprep.subr.mxu0 0.0
  %508 = vmatpush1.msra.mxu0 0.0
  %509 = vmatprep.subr.mxu0 0.0
  %510 = vmatpush1.msra.mxu0 0.0
  %511 = vmatprep.subr.mxu0 0.0
  %512 = vmatpush1.msra.mxu0 0.0
  %513 = vmatprep.subr.mxu0 0.0
  %514 = vmatpush1.msra.mxu0 0.0
  %515 = vmatprep.subr.mxu0 0.0
  %516 = vmatpush1.msra.mxu0 0.0
  %517 = vmatprep.subr.mxu0 0.0
  %518 = vmatpush1.msra.mxu0 0.0
  %519 = vmatprep.subr.mxu0 0.0
  %520 = vmatpush1.msra.mxu0 0.0
  %521 = vmatprep.subr.mxu0 0.0
  %522 = vmatpush1.msra.mxu0 0.0
  %523 = vmatprep.subr.mxu0 0.0
  %524 = vmatpush1.msra.mxu0 0.0
  %525 = vmatprep.subr.mxu0 0.0
  %526 = vmatpush1.msra.mxu0 0.0
  %527 = vmatprep.subr.mxu0 0.0
  %528 = vmatpush1.msra.mxu0 0.0
  %529 = vmatprep.subr.mxu0 0.0
  %530 = vmatpush1.msra.mxu0 0.0
  %531 = vmatprep.subr.mxu0 0.0
  %532 = vmatpush1.msra.mxu0 0.0
  %533 = vmatprep.subr.mxu0 0.0
  %534 = vmatpush1.msra.mxu0 0.0
  %535 = vmatprep.subr.mxu0 0.0
  %536 = vmatpush1.msra.mxu0 0.0
  %537 = vmatprep.subr.mxu0 0.0
  %538 = vmatpush1.msra.mxu0 0.0
  %539 = vmatprep.subr.mxu0 0.0
  %540 = vmatpush1.msra.mxu0 0.0
  %541 = vmatprep.subr.mxu0 0.0
  %542 = vmatpush1.msra.mxu0 0.0
  %543 = vmatprep.mubr.f32.mxu0 0.0
  %544 = vmatmul.mubr.f32.gmra.mrb[0].mxu0 %v166
  %v545 = vpop.f32.mrb[0].mxu0
  %v546 = vadd.f32 %v119, %v545
  %v547 = vpop.f32.mrb[0].mxu0
  %v548 = vadd.f32 %v123, %v547
  %549 = vmatprep.mubr.f32.mxu0 0.0
  %550 = vmatmul.mubr.f32.gmra.mrb[0].mxu0 %v169
  %v551 = vpop.f32.mrb[0].mxu0
  %v552 = vadd.f32 %v119, %v551
  %v553 = vpop.f32.mrb[0].mxu0
  %v554 = vadd.f32 %v123, %v553
  %555 = vdwg.mxu0
  %556 = vmatprep.subr.mxu0 %v27
  %557 = vmatpush1.msra.mxu0 %v26
  %558 = vmatprep.subr.mxu0 %v43
  %559 = vmatpush1.msra.mxu0 %v42
  %560 = vmatprep.subr.mxu0 %v59
  %561 = vmatpush1.msra.mxu0 %v58
  %562 = vmatprep.subr.mxu0 %v75
  %563 = vmatpush1.msra.mxu0 %v74
  %564 = vmatprep.subr.mxu0 0.0
  %565 = vmatpush1.msra.mxu0 0.0
  %566 = vmatprep.subr.mxu0 0.0
  %567 = vmatpush1.msra.mxu0 0.0
  %568 = vmatprep.subr.mxu0 0.0
  %569 = vmatpush1.msra.mxu0 0.0
  %570 = vmatprep.subr.mxu0 0.0
  %571 = vmatpush1.msra.mxu0 0.0
  %572 = vmatprep.subr.mxu0 0.0
  %573 = vmatpush1.msra.mxu0 0.0
  %574 = vmatprep.subr.mxu0 0.0
  %575 = vmatpush1.msra.mxu0 0.0
  %576 = vmatprep.subr.mxu0 0.0
  %577 = vmatpush1.msra.mxu0 0.0
  %578 = vmatprep.subr.mxu0 0.0
  %579 = vmatpush1.msra.mxu0 0.0
  %580 = vmatprep.subr.mxu0 0.0
  %581 = vmatpush1.msra.mxu0 0.0
  %582 = vmatprep.subr.mxu0 0.0
  %583 = vmatpush1.msra.mxu0 0.0
  %584 = vmatprep.subr.mxu0 0.0
  %585 = vmatpush1.msra.mxu0 0.0
  %586 = vmatprep.subr.mxu0 0.0
  %587 = vmatpush1.msra.mxu0 0.0
  %588 = vmatprep.subr.mxu0 0.0
  %589 = vmatpush1.msra.mxu0 0.0
  %590 = vmatprep.subr.mxu0 0.0
  %591 = vmatpush1.msra.mxu0 0.0
  %592 = vmatprep.subr.mxu0 0.0
  %593 = vmatpush1.msra.mxu0 0.0
  %594 = vmatprep.subr.mxu0 0.0
  %595 = vmatpush1.msra.mxu0 0.0
  %596 = vmatprep.subr.mxu0 0.0
  %597 = vmatpush1.msra.mxu0 0.0
  %598 = vmatprep.subr.mxu0 0.0
  %599 = vmatpush1.msra.mxu0 0.0
  %600 = vmatprep.subr.mxu0 0.0
  %601 = vmatpush1.msra.mxu0 0.0
  %602 = vmatprep.subr.mxu0 0.0
  %603 = vmatpush1.msra.mxu0 0.0
  %604 = vmatprep.subr.mxu0 0.0
  %605 = vmatpush1.msra.mxu0 0.0
  %606 = vmatprep.subr.mxu0 0.0
  %607 = vmatpush1.msra.mxu0 0.0
  %608 = vmatprep.subr.mxu0 0.0
  %609 = vmatpush1.msra.mxu0 0.0
  %610 = vmatprep.subr.mxu0 0.0
  %611 = vmatpush1.msra.mxu0 0.0
  %612 = vmatprep.subr.mxu0 0.0
  %613 = vmatpush1.msra.mxu0 0.0
  %614 = vmatprep.subr.mxu0 0.0
  %615 = vmatpush1.msra.mxu0 0.0
  %616 = vmatprep.subr.mxu0 0.0
  %617 = vmatpush1.msra.mxu0 0.0
  %618 = vmatprep.subr.mxu0 0.0
  %619 = vmatpush1.msra.mxu0 0.0
  %620 = vmatprep.mubr.f32.mxu0 0.0
  %621 = vmatmul.mubr.f32.gmra.mrb[0].mxu0 %v166
  %v622 = vpop.f32.mrb[0].mxu0
  %v623 = vadd.f32 %v127, %v622
  %v624 = vpop.f32.mrb[0].mxu0
  %v625 = vadd.f32 %v131, %v624
  %626 = vmatprep.mubr.f32.mxu0 0.0
  %627 = vmatmul.mubr.f32.gmra.mrb[0].mxu0 %v169
  %v628 = vpop.f32.mrb[0].mxu0
  %v629 = vadd.f32 %v127, %v628
  %v630 = vpop.f32.mrb[0].mxu0
  %v631 = vadd.f32 %v131, %v630
  %632 = vdwg.mxu0
  %633 = vmatprep.subr.mxu0 %v29
  %634 = vmatpush1.msra.mxu0 %v28
  %635 = vmatprep.subr.mxu0 %v45
  %636 = vmatpush1.msra.mxu0 %v44
  %637 = vmatprep.subr.mxu0 %v61
  %638 = vmatpush1.msra.mxu0 %v60
  %639 = vmatprep.subr.mxu0 %v77
  %640 = vmatpush1.msra.mxu0 %v76
  %641 = vmatprep.subr.mxu0 0.0
  %642 = vmatpush1.msra.mxu0 0.0
  %643 = vmatprep.subr.mxu0 0.0
  %644 = vmatpush1.msra.mxu0 0.0
  %645 = vmatprep.subr.mxu0 0.0
  %646 = vmatpush1.msra.mxu0 0.0
  %647 = vmatprep.subr.mxu0 0.0
  %648 = vmatpush1.msra.mxu0 0.0
  %649 = vmatprep.subr.mxu0 0.0
  %650 = vmatpush1.msra.mxu0 0.0
  %651 = vmatprep.subr.mxu0 0.0
  %652 = vmatpush1.msra.mxu0 0.0
  %653 = vmatprep.subr.mxu0 0.0
  %654 = vmatpush1.msra.mxu0 0.0
  %655 = vmatprep.subr.mxu0 0.0
  %656 = vmatpush1.msra.mxu0 0.0
  %657 = vmatprep.subr.mxu0 0.0
  %658 = vmatpush1.msra.mxu0 0.0
  %659 = vmatprep.subr.mxu0 0.0
  %660 = vmatpush1.msra.mxu0 0.0
  %661 = vmatprep.subr.mxu0 0.0
  %662 = vmatpush1.msra.mxu0 0.0
  %663 = vmatprep.subr.mxu0 0.0
  %664 = vmatpush1.msra.mxu0 0.0
  %665 = vmatprep.subr.mxu0 0.0
  %666 = vmatpush1.msra.mxu0 0.0
  %667 = vmatprep.subr.mxu0 0.0
  %668 = vmatpush1.msra.mxu0 0.0
  %669 = vmatprep.subr.mxu0 0.0
  %670 = vmatpush1.msra.mxu0 0.0
  %671 = vmatprep.subr.mxu0 0.0
  %672 = vmatpush1.msra.mxu0 0.0
  %673 = vmatprep.subr.mxu0 0.0
  %674 = vmatpush1.msra.mxu0 0.0
  %675 = vmatprep.subr.mxu0 0.0
  %676 = vmatpush1.msra.mxu0 0.0
  %677 = vmatprep.subr.mxu0 0.0
  %678 = vmatpush1.msra.mxu0 0.0
  %679 = vmatprep.subr.mxu0 0.0
  %680 = vmatpush1.msra.mxu0 0.0
  %681 = vmatprep.subr.mxu0 0.0
  %682 = vmatpush1.msra.mxu0 0.0
  %683 = vmatprep.subr.mxu0 0.0
  %684 = vmatpush1.msra.mxu0 0.0
  %685 = vmatprep.subr.mxu0 0.0
  %686 = vmatpush1.msra.mxu0 0.0
  %687 = vmatprep.subr.mxu0 0.0
  %688 = vmatpush1.msra.mxu0 0.0
  %689 = vmatprep.subr.mxu0 0.0
  %690 = vmatpush1.msra.mxu0 0.0
  %691 = vmatprep.subr.mxu0 0.0
  %692 = vmatpush1.msra.mxu0 0.0
  %693 = vmatprep.subr.mxu0 0.0
  %694 = vmatpush1.msra.mxu0 0.0
  %695 = vmatprep.subr.mxu0 0.0
  %696 = vmatpush1.msra.mxu0 0.0
  %697 = vmatprep.mubr.f32.mxu0 0.0
  %698 = vmatmul.mubr.f32.gmra.mrb[0].mxu0 %v166
  %v699 = vpop.f32.mrb[0].mxu0
  %v700 = vadd.f32 %v135, %v699
  %v701 = vpop.f32.mrb[0].mxu0
  %v702 = vadd.f32 %v139, %v701
  %703 = vmatprep.mubr.f32.mxu0 0.0
  %704 = vmatmul.mubr.f32.gmra.mrb[0].mxu0 %v169
  %v705 = vpop.f32.mrb[0].mxu0
  %v706 = vadd.f32 %v135, %v705
  %v707 = vpop.f32.mrb[0].mxu0
  %v708 = vadd.f32 %v139, %v707
  %709 = vdwg.mxu0
  %710 = vmatprep.subr.mxu0 %v31
  %711 = vmatpush1.msra.mxu0 %v30
  %712 = vmatprep.subr.mxu0 %v47
  %713 = vmatpush1.msra.mxu0 %v46
  %714 = vmatprep.subr.mxu0 %v63
  %715 = vmatpush1.msra.mxu0 %v62
  %716 = vmatprep.subr.mxu0 %v79
  %717 = vmatpush1.msra.mxu0 %v78
  %718 = vmatprep.subr.mxu0 0.0
  %719 = vmatpush1.msra.mxu0 0.0
  %720 = vmatprep.subr.mxu0 0.0
  %721 = vmatpush1.msra.mxu0 0.0
  %722 = vmatprep.subr.mxu0 0.0
  %723 = vmatpush1.msra.mxu0 0.0
  %724 = vmatprep.subr.mxu0 0.0
  %725 = vmatpush1.msra.mxu0 0.0
  %726 = vmatprep.subr.mxu0 0.0
  %727 = vmatpush1.msra.mxu0 0.0
  %728 = vmatprep.subr.mxu0 0.0
  %729 = vmatpush1.msra.mxu0 0.0
  %730 = vmatprep.subr.mxu0 0.0
  %731 = vmatpush1.msra.mxu0 0.0
  %732 = vmatprep.subr.mxu0 0.0
  %733 = vmatpush1.msra.mxu0 0.0
  %734 = vmatprep.subr.mxu0 0.0
  %735 = vmatpush1.msra.mxu0 0.0
  %736 = vmatprep.subr.mxu0 0.0
  %737 = vmatpush1.msra.mxu0 0.0
  %738 = vmatprep.subr.mxu0 0.0
  %739 = vmatpush1.msra.mxu0 0.0
  %740 = vmatprep.subr.mxu0 0.0
  %741 = vmatpush1.msra.mxu0 0.0
  %742 = vmatprep.subr.mxu0 0.0
  %743 = vmatpush1.msra.mxu0 0.0
  %744 = vmatprep.subr.mxu0 0.0
  %745 = vmatpush1.msra.mxu0 0.0
  %746 = vmatprep.subr.mxu0 0.0
  %747 = vmatpush1.msra.mxu0 0.0
  %748 = vmatprep.subr.mxu0 0.0
  %749 = vmatpush1.msra.mxu0 0.0
  %750 = vmatprep.subr.mxu0 0.0
  %751 = vmatpush1.msra.mxu0 0.0
  %752 = vmatprep.subr.mxu0 0.0
  %753 = vmatpush1.msra.mxu0 0.0
  %754 = vmatprep.subr.mxu0 0.0
  %755 = vmatpush1.msra.mxu0 0.0
  %756 = vmatprep.subr.mxu0 0.0
  %757 = vmatpush1.msra.mxu0 0.0
  %758 = vmatprep.subr.mxu0 0.0
  %759 = vmatpush1.msra.mxu0 0.0
  %760 = vmatprep.subr.mxu0 0.0
  %761 = vmatpush1.msra.mxu0 0.0
  %762 = vmatprep.subr.mxu0 0.0
  %763 = vmatpush1.msra.mxu0 0.0
  %764 = vmatprep.subr.mxu0 0.0
  %765 = vmatpush1.msra.mxu0 0.0
  %766 = vmatprep.subr.mxu0 0.0
  %767 = vmatpush1.msra.mxu0 0.0
  %768 = vmatprep.subr.mxu0 0.0
  %769 = vmatpush1.msra.mxu0 0.0
  %770 = vmatprep.subr.mxu0 0.0
  %771 = vmatpush1.msra.mxu0 0.0
  %772 = vmatprep.subr.mxu0 0.0
  %773 = vmatpush1.msra.mxu0 0.0
  %774 = vmatprep.mubr.f32.mxu0 0.0
  %775 = vmatmul.mubr.f32.gmra.mrb[0].mxu0 %v166
  %v776 = vpop.f32.mrb[0].mxu0
  %v777 = vadd.f32 %v143, %v776
  %v778 = vpop.f32.mrb[0].mxu0
  %v779 = vadd.f32 %v147, %v778
  %780 = vmatprep.mubr.f32.mxu0 0.0
  %781 = vmatmul.mubr.f32.gmra.mrb[0].mxu0 %v169
  %v782 = vpop.f32.mrb[0].mxu0
  %v783 = vadd.f32 %v143, %v782
  %v784 = vpop.f32.mrb[0].mxu0
  %v785 = vadd.f32 %v147, %v784
  %786 = vdwg.mxu0
  %787 = vst [vmem:[%s3] sm:$0xff] %v238
  %788 = vst [vmem:[%s3 + $0x8] sm:$0xff] %v240
  %789 = vst [vmem:[%s3 + $0x10] sm:$0xff] %v315
  %790 = vst [vmem:[%s3 + $0x18] sm:$0xff] %v317
  %791 = vst [vmem:[%s3 + $0x20] sm:$0xff] %v392
  %792 = vst [vmem:[%s3 + $0x28] sm:$0xff] %v394
  %793 = vst [vmem:[%s3 + $0x30] sm:$0xff] %v469
  %794 = vst [vmem:[%s3 + $0x38] sm:$0xff] %v471
  %795 = vst [vmem:[%s3 + $0x40] sm:$0xff] %v546
  %796 = vst [vmem:[%s3 + $0x48] sm:$0xff] %v548
  %797 = vst [vmem:[%s3 + $0x50] sm:$0xff] %v623
  %798 = vst [vmem:[%s3 + $0x58] sm:$0xff] %v625
  %799 = vst [vmem:[%s3 + $0x60] sm:$0xff] %v700
  %800 = vst [vmem:[%s3 + $0x68] sm:$0xff] %v702
  %801 = vst [vmem:[%s3 + $0x70] sm:$0xff] %v777
  %802 = vst [vmem:[%s3 + $0x78] sm:$0xff] %v779
  %803 = vst [vmem:[%s3 + $0x80] sm:$0xff] %v244
  %804 = vst [vmem:[%s3 + $0x88] sm:$0xff] %v246
  %805 = vst [vmem:[%s3 + $0x90] sm:$0xff] %v321
  %806 = vst [vmem:[%s3 + $0x98] sm:$0xff] %v323
  %807 = vst [vmem:[%s3 + $0xa0] sm:$0xff] %v398
  %808 = vst [vmem:[%s3 + $0xa8] sm:$0xff] %v400
  %809 = vst [vmem:[%s3 + $0xb0] sm:$0xff] %v475
  %810 = vst [vmem:[%s3 + $0xb8] sm:$0xff] %v477
  %811 = vst [vmem:[%s3 + $0xc0] sm:$0xff] %v552
  %812 = vst [vmem:[%s3 + $0xc8] sm:$0xff] %v554
  %813 = vst [vmem:[%s3 + $0xd0] sm:$0xff] %v629
  %814 = vst [vmem:[%s3 + $0xd8] sm:$0xff] %v631
  %815 = vst [vmem:[%s3 + $0xe0] sm:$0xff] %v706
  %816 = vst [vmem:[%s3 + $0xe8] sm:$0xff] %v708
  %817 = vst [vmem:[%s3 + $0xf0] sm:$0xff] %v783
  %818 = vst [vmem:[%s3 + $0xf8] sm:$0xff] %v785
  // Predicated region
  $region14: #{policy_head.1} parent=0 // pred_check
    _
  $region15: #{policy_head.1} parent=0 // pred_check_branch
    %820 = sbr.rel (0) target = $region17
  $region16: #{policy_head.1} parent=0 // pred_region
    _
  $region17: #{policy_head.1} parent=0 // pred_fallthru
    _
  // Predicated region
  $region18: #{policy_head.1} parent=0 // pred_check
    _
  $region19: #{policy_head.1} parent=0 // pred_check_branch
    %822 = sbr.rel (0) target = $region21
  $region20: #{policy_head.1} parent=0 // pred_region
    _
  $region21: #{policy_head.1} parent=0 // pred_fallthru
    _

</llo_original>
